<compile_context>
chip_gen: v7x
topology: tpu7x:2x2x1
jax: 0.10.0
libtpu: 0.0.40
codegen_flags: <defaults>
</compile_context>

<pallas_src>
import functools

import jax
import jax.numpy as jnp
from jax.experimental import pallas as pl
from jax.experimental.pallas import tpu as pltpu


def _round_up(x, m):
    return (x + m - 1) // m * m


def _choose_batch_tile(B, L, D, itemsize=4, x_budget_bytes=2 << 20):
    """Pick TB (multiple of 8) so double-buffered x tiles stay well inside the
    smallest (v5e, 16 MiB) scoped-VMEM default, and keep >= 2 grid steps when
    the batch allows it (v7x has 2 TensorCores)."""
    b8 = _round_up(B, 8)
    cap = max(8, (x_budget_bytes // (2 * L * D * itemsize)) // 8 * 8)
    tb = min(b8, cap)
    if tb == b8 and b8 >= 16:
        tb = _round_up(b8 // 2, 8)  # split into at least 2 grid steps
    return tb


def _sap_kernel(x_ref, w1_ref, b1_ref, w2_ref, o_ref, *, mm_dtype):
    # x_ref : (TB, L, D) f32        w1_ref: (H, D)  (PyTorch [out, in])
    # b1_ref: (1, H)   f32          w2_ref: (D, H)  (PyTorch [out, in])
    # o_ref : (TB, D)
    tb, seq, d = x_ref.shape
    x = x_ref[...]                                   # [TB, L, D] f32
    x2 = x.reshape(tb * seq, d)                      # [(TB*L), D]

    # h = tanh(x @ W1^T + b1); contract the `in` axis of W1 directly.
    h = jnp.tanh(
        jax.lax.dot_general(
            x2.astype(mm_dtype), w1_ref[...].astype(mm_dtype),
            dimension_numbers=(((1,), (1,)), ((), ())),
            preferred_element_type=jnp.float32,
        )
        + b1_ref[...]
    )                                                # [(TB*L), H] f32

    # scores = h @ W2^T.  b2 is omitted: a per-feature constant shared by all
    # L rows cancels exactly in the softmax over the length axis.
    s = jax.lax.dot_general(
        h.astype(mm_dtype), w2_ref[...].astype(mm_dtype),
        dimension_numbers=(((1,), (1,)), ((), ())),
        preferred_element_type=jnp.float32,
    ).reshape(tb, seq, d)                            # [TB, L, D] f32

    # Numerically stable softmax over the length axis, per batch row.
    s = s - jnp.max(s, axis=1, keepdims=True)
    e = jnp.exp(s)
    alpha = e * pl.reciprocal(jnp.sum(e, axis=1, keepdims=True), approx=True)

    # Weighted sum over length -> [TB, D] (f32 data path).
    o_ref[...] = jnp.sum(alpha * x, axis=1).astype(o_ref.dtype)


@functools.partial(jax.jit, static_argnames=("matmul_dtype",))
def self_attention_pooling(x, w1, b1, w2, b2=None, *, matmul_dtype=jnp.bfloat16):
    """Forward pass of SelfAttentionPooling.

    x : [B, L, D] or [B, C, L, F] (flattened to D = C*F like the PyTorch module)
    w1: [H, D], b1: [H]   (attention_linear, PyTorch [out, in] layout)
    w2: [D, H], b2: [D]   (attention_vector; accepted for API parity but never
                           enters the kernel — it cancels in the length-axis
                           softmax)
    returns [B, D]
    """
    del b2  # mathematically redundant under softmax over the length axis

    if x.ndim == 4:
        # PyTorch: x.transpose(1, 2).reshape(B, x_shape[2], -1)
        B, C, L, F = x.shape
        x = jnp.transpose(x, (0, 2, 1, 3)).reshape(B, L, C * F)

    B, L, D = x.shape
    H = w1.shape[0]

    tb = _choose_batch_tile(B, L, D, itemsize=x.dtype.itemsize)
    B_pad = _round_up(B, tb)
    if B_pad != B:
        # Zero padding is safe: padded rows produce finite softmax weights but
        # contribute alpha * 0 = 0 and are sliced off below.
        x = jnp.pad(x, ((0, B_pad - B), (0, 0), (0, 0)))

    b1_2d = b1.reshape(1, H)

    # Conservative VMEM estimate (double-buffered x/out + weights + temporaries)
    # with headroom; clamped so it is valid on every generation (v7x: 64 MiB).
    itemsize = 4
    est = 2 * tb * L * D * itemsize          # double-buffered x
    est += 2 * tb * D * itemsize             # double-buffered output
    est += 2 * (2 * H * D + H) * itemsize    # weights + bias
    est += 4 * tb * L * max(D, H) * itemsize  # h / s / e / alpha temporaries
    vmem_limit = int(min(max(2 * est, 16 << 20), 48 << 20))

    kernel = functools.partial(_sap_kernel, mm_dtype=matmul_dtype)

    out = pl.pallas_call(
        kernel,
        out_shape=jax.ShapeDtypeStruct((B_pad, D), x.dtype),
        grid_spec=pltpu.PrefetchScalarGridSpec(
            num_scalar_prefetch=0,
            grid=(B_pad // tb,),
            in_specs=[
                pl.BlockSpec((tb, L, D), lambda b: (b, 0, 0)),  # x (TB batches)
                pl.BlockSpec((H, D), lambda b: (0, 0)),          # W1 [out, in]
                pl.BlockSpec((1, H), lambda b: (0, 0)),          # b1
                pl.BlockSpec((D, H), lambda b: (0, 0)),          # W2 [out, in]
            ],
            out_specs=pl.BlockSpec((tb, D), lambda b: (b, 0)),   # dense slab
        ),
        compiler_params=pltpu.CompilerParams(
            dimension_semantics=("parallel",),
            vmem_limit_bytes=vmem_limit,
        ),
    )(x, w1, b1_2d, w2)

    return out[:B]


def _reference(x, w1, b1, w2, b2):
    """Pure-JAX reference mirroring the PyTorch forward (includes b2)."""
    if x.ndim == 4:
        B, C, L, F = x.shape
        x = jnp.transpose(x, (0, 2, 1, 3)).reshape(B, L, C * F)
    h = jnp.tanh(jnp.einsum("bld,hd->blh", x, w1) + b1)
    s = jnp.einsum("blh,dh->bld", h, w2) + b2
    alpha = jax.nn.softmax(s, axis=1)
    return jnp.sum(alpha * x, axis=1)


def _init_linear(key, out_dim, in_dim):
    """Deterministic init mimicking nn.Linear default (uniform +/- 1/sqrt(in))."""
    kw, kb = jax.random.split(key)
    bound = 1.0 / jnp.sqrt(jnp.float32(in_dim))
    w = jax.random.uniform(kw, (out_dim, in_dim), jnp.float32, -bound, bound)
    b = jax.random.uniform(kb, (out_dim,), jnp.float32, -bound, bound)
    return w, b


if __name__ == "__main__":
    key = jax.random.PRNGKey(0)
    k_x, k_l1, k_l2 = jax.random.split(key, 3)

    # 4-D input [B, C, L, F] -> module flattens to [B, L, C*F]; input_dim = C*F.
    # B=16 so the batch-tiled grid runs TB=8 rows/step over 2 steps.
    B, C, L, F = 16, 4, 16, 8
    input_dim = C * F       # 32
    hidden_dim = 16

    x = jax.random.normal(k_x, (B, C, L, F), jnp.float32)
    w1, b1 = _init_linear(k_l1, hidden_dim, input_dim)   # attention_linear
    w2, b2 = _init_linear(k_l2, input_dim, hidden_dim)   # attention_vector

    ref = _reference(x, w1, b1, w2, b2)

    # f32-operand run: near-exact vs reference (only the approximate EUP
    # reciprocal in the softmax normalizer introduces ~1e-4 relative error).
    out_f32 = self_attention_pooling(x, w1, b1, w2, b2, matmul_dtype=jnp.float32)
    jax.block_until_ready(out_f32)
    assert out_f32.shape == (B, input_dim), out_f32.shape
    assert jnp.allclose(out_f32, ref, atol=2e-3, rtol=2e-3), (
        float(jnp.max(jnp.abs(out_f32 - ref))))

    # Default bf16 MXU-operand run (recommended on v6e/v7x): looser tolerance.
    out = self_attention_pooling(x, w1, b1, w2, b2)
    jax.block_until_ready(out)
    assert out.shape == (B, input_dim), out.shape
    assert jnp.allclose(out, ref, atol=3e-2, rtol=0.0), (
        float(jnp.max(jnp.abs(out - ref))))

    print("KERNEL_OK")
</pallas_src>

<mosaic_0001>
module attributes {stable_mosaic.version = 11 : i64} {
  func.func @_sap_kernel(%arg0: i32, %arg1: memref<8x16x32xf32, #tpu.memory_space<vmem>>, %arg2: memref<16x32xf32, #tpu.memory_space<vmem>>, %arg3: memref<1x16xf32, #tpu.memory_space<vmem>>, %arg4: memref<32x16xf32, #tpu.memory_space<vmem>>, %arg5: memref<8x32xf32, #tpu.memory_space<vmem>>) attributes {dimension_semantics = [#tpu.dimension_semantics<parallel>], iteration_bounds = array<i64: 2>, scalar_prefetch = 0 : i64, scratch_operands = 0 : i64, tpu.core_type = #tpu.core_type<tc>, window_params = [{transform_indices = @transform_0, window_bounds = array<i64: 8, 16, 32>}, {pipeline_mode = #tpu.pipeline_mode<synchronous>, transform_indices = @transform_1, window_bounds = array<i64: 16, 32>}, {pipeline_mode = #tpu.pipeline_mode<synchronous>, transform_indices = @transform_2, window_bounds = array<i64: 1, 16>}, {pipeline_mode = #tpu.pipeline_mode<synchronous>, transform_indices = @transform_3, window_bounds = array<i64: 32, 16>}, {transform_indices = @transform_4, window_bounds = array<i64: 8, 32>}]} {
    %c0 = arith.constant 0 : index
    %c0_0 = arith.constant 0 : index
    %c0_1 = arith.constant 0 : index
    %0 = vector.load %arg1[%c0, %c0_0, %c0_1] : memref<8x16x32xf32, #tpu.memory_space<vmem>>, vector<8x16x32xf32>
    %1 = vector.shape_cast %0 : vector<8x16x32xf32> to vector<128x32xf32>
    %c0_2 = arith.constant 0 : index
    %c0_3 = arith.constant 0 : index
    %2 = vector.load %arg2[%c0_2, %c0_3] : memref<16x32xf32, #tpu.memory_space<vmem>>, vector<16x32xf32>
    %cst = arith.constant dense<0.000000e+00> : vector<128x16xf32>
    %3 = tpu.matmul %1, %2, %cst {dimension_numbers = #tpu.dot_dimension_numbers<[1], [1], [0], [0], [0, 0, 1, 0], [], []>} : vector<128x32xf32>, vector<16x32xf32>, vector<128x16xf32> -> vector<128x16xf32>
    %c0_4 = arith.constant 0 : index
    %c0_5 = arith.constant 0 : index
    %4 = vector.load %arg3[%c0_4, %c0_5] : memref<1x16xf32, #tpu.memory_space<vmem>>, vector<1x16xf32>
    %5 = vector.broadcast %4 : vector<1x16xf32> to vector<128x16xf32>
    %6 = arith.addf %3, %5 : vector<128x16xf32>
    %7 = math.tanh %6 : vector<128x16xf32>
    %c0_6 = arith.constant 0 : index
    %c0_7 = arith.constant 0 : index
    %8 = vector.load %arg4[%c0_6, %c0_7] : memref<32x16xf32, #tpu.memory_space<vmem>>, vector<32x16xf32>
    %cst_8 = arith.constant dense<0.000000e+00> : vector<128x32xf32>
    %9 = tpu.matmul %7, %8, %cst_8 {dimension_numbers = #tpu.dot_dimension_numbers<[1], [1], [0], [0], [0, 0, 1, 0], [], []>} : vector<128x16xf32>, vector<32x16xf32>, vector<128x32xf32> -> vector<128x32xf32>
    %10 = vector.shape_cast %9 : vector<128x32xf32> to vector<8x16x32xf32>
    %cst_9 = arith.constant dense<0xFF800000> : vector<8x32xf32>
    %11 = vector.multi_reduction <maximumf>, %10, %cst_9 [1] : vector<8x16x32xf32> to vector<8x32xf32>
    %12 = vector.shape_cast %11 : vector<8x32xf32> to vector<8x1x32xf32>
    %13 = vector.broadcast %12 : vector<8x1x32xf32> to vector<8x16x32xf32>
    %14 = arith.subf %10, %13 : vector<8x16x32xf32>
    %15 = math.exp %14 : vector<8x16x32xf32>
    %cst_10 = arith.constant dense<0.000000e+00> : vector<8x32xf32>
    %16 = vector.multi_reduction <add>, %15, %cst_10 [1] : vector<8x16x32xf32> to vector<8x32xf32>
    %17 = vector.shape_cast %16 : vector<8x32xf32> to vector<8x1x32xf32>
    %18 = tpu.reciprocal %17 {approx = true} : vector<8x1x32xf32> -> vector<8x1x32xf32>
    %19 = vector.broadcast %18 : vector<8x1x32xf32> to vector<8x16x32xf32>
    %20 = arith.mulf %15, %19 : vector<8x16x32xf32>
    %21 = arith.mulf %20, %0 : vector<8x16x32xf32>
    %cst_11 = arith.constant dense<0.000000e+00> : vector<8x32xf32>
    %22 = vector.multi_reduction <add>, %21, %cst_11 [1] : vector<8x16x32xf32> to vector<8x32xf32>
    %c0_12 = arith.constant 0 : index
    %c0_13 = arith.constant 0 : index
    %23 = vector.load %arg5[%c0_12, %c0_13] : memref<8x32xf32, #tpu.memory_space<vmem>>, vector<8x32xf32>
    tpu.vector_store %arg5[%c0_12, %c0_13], %22 {strides = array<i32>} : memref<8x32xf32, #tpu.memory_space<vmem>>, vector<8x32xf32>,
    return
  }
  func.func @transform_0(%arg0: i32) -> (i32, i32, i32) {
    %c0_i32 = arith.constant 0 : i32
    %c0_i32_0 = arith.constant 0 : i32
    %c0_i32_1 = arith.constant 0 : i32
    return %arg0, %c0_i32, %c0_i32_0 : i32, i32, i32
  }
  func.func @transform_1(%arg0: i32) -> (i32, i32) {
    %c0_i32 = arith.constant 0 : i32
    %c0_i32_0 = arith.constant 0 : i32
    %c0_i32_1 = arith.constant 0 : i32
    return %c0_i32, %c0_i32_0 : i32, i32
  }
  func.func @transform_2(%arg0: i32) -> (i32, i32) {
    %c0_i32 = arith.constant 0 : i32
    %c0_i32_0 = arith.constant 0 : i32
    %c0_i32_1 = arith.constant 0 : i32
    return %c0_i32, %c0_i32_0 : i32, i32
  }
  func.func @transform_3(%arg0: i32) -> (i32, i32) {
    %c0_i32 = arith.constant 0 : i32
    %c0_i32_0 = arith.constant 0 : i32
    %c0_i32_1 = arith.constant 0 : i32
    return %c0_i32, %c0_i32_0 : i32, i32
  }
  func.func @transform_4(%arg0: i32) -> (i32, i32) {
    %c0_i32 = arith.constant 0 : i32
    %c0_i32_0 = arith.constant 0 : i32
    return %arg0, %c0_i32 : i32, i32
  }
}

</mosaic_0001>

<llo_original>
// kernel: self_attention_pooling.1
$region0: #{self_attention_pooling.1}
  #allocation0 [shape = 'u32[]', space=smem, size = 0x4, offset = 0x4, fixed_abs, tag = 'smem constant byte address 0x4 - core index']
  #allocation1 [shape = 'u32[144,128]{1,0:T(1,128)}', space=vmem, size = 0x12000, scoped, tag = 'internal scratch']
  %s0 = inlined_call_operand.vmem [shape: f32[16,16,32], index: 0, kind: input, shape index: {}]
  %s1 = inlined_call_operand.vmem [shape: f32[16,32], index: 1, kind: input, shape index: {}]
  %s2 = inlined_call_operand.vmem [shape: f32[1,16], index: 2, kind: input, shape index: {}]
  %s3 = inlined_call_operand.vmem [shape: f32[32,16], index: 3, kind: input, shape index: {}]
  %s4 = inlined_call_operand.hbm [shape: f32[16,32], index: 4, kind: output, shape index: {}]
  %s5 = sld [smem:[#allocation0]]
  $region49: #{self_attention_pooling.1} parent=0
    _
  %s7 = ssub.s32 1, %s5
  %s8 = scalar_select 0, %s7, %s5
  $region1: #{self_attention_pooling.1} parent=0
    #allocation2 [shape = 'u8[8192]{0}', space=vmem, size = 0x2000, scoped, tag = 'output window, operand 0']
    #allocation3 [shape = 's32[2]{0}', space=sflag, size = 0x8, scoped, tag = 'scoped memory for self_attention_pooling.1']
    %9 = vsyncpa [#allocation3], 0
    %s10 = scalar_lea.sflag [#allocation3], 1
    %11 = vsyncpa %s10, 0
    loop: start=0, step=1, limit=4
    $region2: #{self_attention_pooling.1} parent=1 // loop_pre_header
      _
    $region3: #{self_attention_pooling.1} parent=1 // loop_header
      %s13 = sphi 0, %s17
      %p14 = scmp.ge.s32.totalorder %s13, 4
      %s23 = sphi 0, %s25
      %s26 = sphi 0, %s23
      %s27 = sphi 0, %s26
      %s43 = sphi 0, %s27
      %s47 = sphi 0, %s47
      %s49 = sphi 0, %s47
      %s50 = sphi 0, %s49
      %s64 = sphi 0, %s50
      %s68 = sphi 0, %s68
      %s70 = sphi 0, %s68
      %s71 = sphi 0, %s70
      %s85 = sphi 0, %s71
      %s89 = sphi 0, %s89
      %s91 = sphi 0, %s89
      %s92 = sphi 0, %s91
      %s106 = sphi 0, %s92
      %s112 = sphi 0, %s114
      %s115 = sphi 0, %s112
      %s116 = sphi 0, %s115
      %s132 = sphi 0, %s116
    $region4: #{self_attention_pooling.1} parent=1 // loop_header_branch
      %16 = sbr.rel (%p14) target = $region8
    $region5: #{self_attention_pooling.1} parent=1 // loop_body
      %s18 = ssub.s32 %s13, 1
      %s19 = ssub.s32 %s13, 2
      %s20 = sadd.s32 %s13, 1
      %s21 = ssub.s32 %s13, %s20
      %p22 = scmp.eq.s32.totalorder %s21, 0
      %s24 = sadd.s32 %s23, 1
      %s25 = scalar_select %p22, %s23, %s24
      %p28 = pneg %p22
      %p29 = scmp.eq.s32.totalorder %s13, 1
      %p30 = por %p28, %p29
      %p31 = scmp.ne.s32.totalorder %s23, %s26
      %p32 = scmp.eq.s32.totalorder %s13, 0
      %p33 = por %p31, %p32
      %p34 = scmp.ne.s32.totalorder %s23, %s26
      %p35 = scmp.eq.s32.totalorder %s18, 1
      %p36 = por %p34, %p35
      %p37 = scmp.ne.s32.totalorder %s26, %s27
      %p38 = scmp.eq.s32.totalorder %s18, 0
      %p39 = por %p37, %p38
      %p40 = scmp.ne.s32.totalorder %s26, %s27
      %p41 = scmp.eq.s32.totalorder %s19, 1
      %p42 = por %p40, %p41
      %p44 = scmp.ne.s32.totalorder %s27, %s43
      %p45 = scmp.eq.s32.totalorder %s19, 0
      %p46 = por %p44, %p45
      %s48 = sadd.s32 %s47, 1
      %p51 = scmp.eq.s32.totalorder %s13, 1
      %p52 = scmp.ne.s32.totalorder %s47, %s49
      %p53 = scmp.eq.s32.totalorder %s13, 0
      %p54 = por %p52, %p53
      %p55 = scmp.ne.s32.totalorder %s47, %s49
      %p56 = scmp.eq.s32.totalorder %s18, 1
      %p57 = por %p55, %p56
      %p58 = scmp.ne.s32.totalorder %s49, %s50
      %p59 = scmp.eq.s32.totalorder %s18, 0
      %p60 = por %p58, %p59
      %p61 = scmp.ne.s32.totalorder %s49, %s50
      %p62 = scmp.eq.s32.totalorder %s19, 1
      %p63 = por %p61, %p62
      %p65 = scmp.ne.s32.totalorder %s50, %s64
      %p66 = scmp.eq.s32.totalorder %s19, 0
      %p67 = por %p65, %p66
      %s69 = sadd.s32 %s68, 1
      %p72 = scmp.eq.s32.totalorder %s13, 1
      %p73 = scmp.ne.s32.totalorder %s68, %s70
      %p74 = scmp.eq.s32.totalorder %s13, 0
      %p75 = por %p73, %p74
      %p76 = scmp.ne.s32.totalorder %s68, %s70
      %p77 = scmp.eq.s32.totalorder %s18, 1
      %p78 = por %p76, %p77
      %p79 = scmp.ne.s32.totalorder %s70, %s71
      %p80 = scmp.eq.s32.totalorder %s18, 0
      %p81 = por %p79, %p80
      %p82 = scmp.ne.s32.totalorder %s70, %s71
      %p83 = scmp.eq.s32.totalorder %s19, 1
      %p84 = por %p82, %p83
      %p86 = scmp.ne.s32.totalorder %s71, %s85
      %p87 = scmp.eq.s32.totalorder %s19, 0
      %p88 = por %p86, %p87
      %s90 = sadd.s32 %s89, 1
      %p93 = scmp.eq.s32.totalorder %s13, 1
      %p94 = scmp.ne.s32.totalorder %s89, %s91
      %p95 = scmp.eq.s32.totalorder %s13, 0
      %p96 = por %p94, %p95
      %p97 = scmp.ne.s32.totalorder %s89, %s91
      %p98 = scmp.eq.s32.totalorder %s18, 1
      %p99 = por %p97, %p98
      %p100 = scmp.ne.s32.totalorder %s91, %s92
      %p101 = scmp.eq.s32.totalorder %s18, 0
      %p102 = por %p100, %p101
      %p103 = scmp.ne.s32.totalorder %s91, %s92
      %p104 = scmp.eq.s32.totalorder %s19, 1
      %p105 = por %p103, %p104
      %p107 = scmp.ne.s32.totalorder %s92, %s106
      %p108 = scmp.eq.s32.totalorder %s19, 0
      %p109 = por %p107, %p108
      %s110 = ssub.s32 %s13, %s20
      %p111 = scmp.eq.s32.totalorder %s110, 0
      %s113 = sadd.s32 %s112, 1
      %s114 = scalar_select %p111, %s112, %s113
      %p117 = pneg %p111
      %p118 = scmp.eq.s32.totalorder %s13, 1
      %p119 = por %p117, %p118
      %p120 = scmp.ne.s32.totalorder %s112, %s115
      %p121 = scmp.eq.s32.totalorder %s13, 0
      %p122 = por %p120, %p121
      %p123 = scmp.ne.s32.totalorder %s112, %s115
      %p124 = scmp.eq.s32.totalorder %s18, 1
      %p125 = por %p123, %p124
      %p126 = scmp.ne.s32.totalorder %s115, %s116
      %p127 = scmp.eq.s32.totalorder %s18, 0
      %p128 = por %p126, %p127
      %p129 = scmp.ne.s32.totalorder %s115, %s116
      %p130 = scmp.eq.s32.totalorder %s19, 1
      %p131 = por %p129, %p130
      %p133 = scmp.ne.s32.totalorder %s116, %s132
      %p134 = scmp.eq.s32.totalorder %s19, 0
      %p135 = por %p133, %p134
      %p136 = scmp.le.s32.totalorder 1, %s13
      %p137 = scmp.lt.s32.totalorder %s13, 3
      %p138 = pnand %p136, %p137
      %p139 = pneg %p138
      // Predicated region
      $region9: #{self_attention_pooling.1} parent=5 // pred_check
        _
      $region10: #{self_attention_pooling.1} parent=5 // pred_check_branch
        %141 = sbr.rel (%p138) target = $region12
      $region11: #{self_attention_pooling.1} parent=5 // pred_region
        %s142 = ssub.s32 %s13, 1
        // Predicated region
        $region13: #{self_attention_pooling.1} parent=11 // pred_check
          %p143 = pneg %p60
        $region14: #{self_attention_pooling.1} parent=11 // pred_check_branch
          %145 = sbr.rel (%p143) target = $region16
        $region15: #{self_attention_pooling.1} parent=11 // pred_region
          _
        $region16: #{self_attention_pooling.1} parent=11 // pred_fallthru
          _
        // Predicated region
        $region17: #{self_attention_pooling.1} parent=11 // pred_check
          %p146 = pneg %p81
        $region18: #{self_attention_pooling.1} parent=11 // pred_check_branch
          %148 = sbr.rel (%p146) target = $region20
        $region19: #{self_attention_pooling.1} parent=11 // pred_region
          _
        $region20: #{self_attention_pooling.1} parent=11 // pred_fallthru
          _
        // Predicated region
        $region21: #{self_attention_pooling.1} parent=11 // pred_check
          %p149 = pneg %p102
        $region22: #{self_attention_pooling.1} parent=11 // pred_check_branch
          %151 = sbr.rel (%p149) target = $region24
        $region23: #{self_attention_pooling.1} parent=11 // pred_region
          _
        $region24: #{self_attention_pooling.1} parent=11 // pred_fallthru
          _
      $region12: #{self_attention_pooling.1} parent=5 // pred_fallthru
        _
      %p152 = scmp.lt.s32.totalorder %s13, 2
      // Predicated region
      $region25: #{self_attention_pooling.1} parent=5 // pred_check
        %p153 = pneg %p152
      $region26: #{self_attention_pooling.1} parent=5 // pred_check_branch
        %155 = sbr.rel (%p153) target = $region28
      $region27: #{self_attention_pooling.1} parent=5 // pred_region
        // Predicated region
        $region29: #{self_attention_pooling.1} parent=27 // pred_check
          %p156 = pneg %p33
        $region30: #{self_attention_pooling.1} parent=27 // pred_check_branch
          %158 = sbr.rel (%p156) target = $region32
        $region31: #{self_attention_pooling.1} parent=27 // pred_region
          %s159 = smul.u32 8, %s13
          %p160 = scmp.lt.s32.totalorder %s159, 15
          %s161 = scalar_select %p160, %s159, 15
          %s162 = smul.addr %s161, 2
          %s163 = smul.addr %s162, 8
          %s164 = scalar_lea.vmem %s0, %s163
          %s165 = smul.u32 8, %s13
        $region32: #{self_attention_pooling.1} parent=27 // pred_fallthru
          _
      $region28: #{self_attention_pooling.1} parent=5 // pred_fallthru
        _
      %p166 = scmp.le.s32.totalorder 1, %s13
      %p167 = scmp.lt.s32.totalorder %s13, 3
      %p168 = pnand %p166, %p167
      %p169 = pneg %p168
      // Predicated region
      $region33: #{self_attention_pooling.1} parent=5 // pred_check
        _
      $region34: #{self_attention_pooling.1} parent=5 // pred_check_branch
        %171 = sbr.rel (%p168) target = $region36
      $region35: #{self_attention_pooling.1} parent=5 // pred_region
        %s172 = ssub.s32 %s13, 1
        %s173 = smul.u32 8, %s18
        %p174 = scmp.lt.s32.totalorder %s173, 15
        %s175 = scalar_select %p174, %s173, 15
        %s176 = smul.addr %s175, 2
        %s177 = smul.addr %s176, 8
        %s178 = scalar_lea.vmem %s0, %s177
        %p179 = pneg %p39
        %p180 = pneg %p36
        %p181 = pneg %p60
        %p182 = pneg %p57
        %p183 = pneg %p81
        %p184 = pneg %p78
        %p185 = pneg %p102
        %p186 = pneg %p99
        %p187 = pneg %p128
        %p188 = pneg %p125
        %s189 = sand.u32 %s115, 1
        %s190 = scalar_lea.sflag [#allocation3], %s189
        %s191 = sand.u32 %s115, 1
        %s192 = smul.addr %s191, 8
        %s193 = scalar_lea.vmem [#allocation2], %s192
        %s194 = smul.u32 8, %s18
        %p195 = scmp.lt.s32.totalorder %s194, 15
        %s196 = scalar_select %p195, %s194, 15
        %s197 = smul.addr %s196, 2
        %s198 = smul.addr %s197, 8
        %s199 = scalar_lea.vmem %s0, %s198
        %s200 = smul.u32 8, %s18
        %v201 = vld [vmem:[%s199] sm:$0xff]
        %v202 = vld [vmem:[%s199 + $0x8] sm:$0xff]
        %v203 = vld [vmem:[%s199 + $0x10] sm:$0xff]
        %v204 = vld [vmem:[%s199 + $0x18] sm:$0xff]
        %v205 = vld [vmem:[%s199 + $0x20] sm:$0xff]
        %v206 = vld [vmem:[%s199 + $0x28] sm:$0xff]
        %v207 = vld [vmem:[%s199 + $0x30] sm:$0xff]
        %v208 = vld [vmem:[%s199 + $0x38] sm:$0xff]
        %v209 = vld [vmem:[%s199 + $0x40] sm:$0xff]
        %v210 = vld [vmem:[%s199 + $0x48] sm:$0xff]
        %v211 = vld [vmem:[%s199 + $0x50] sm:$0xff]
        %v212 = vld [vmem:[%s199 + $0x58] sm:$0xff]
        %v213 = vld [vmem:[%s199 + $0x60] sm:$0xff]
        %v214 = vld [vmem:[%s199 + $0x68] sm:$0xff]
        %v215 = vld [vmem:[%s199 + $0x70] sm:$0xff]
        %v216 = vld [vmem:[%s199 + $0x78] sm:$0xff]
        %v217 = vld [vmem:[%s1] sm:$0xff]
        %v218 = vld [vmem:[%s1 + $0x8] sm:$0xff]
        %v219 = vld [vmem:[%s2] sm:$0x1]
        %v221 = vlaneseq
        %v222 = vshrl.u32 %v221, 7
        %v223 = vsub.s32 0, %v222
        %v224 = vrot.slane %v219, %v223
        %vm226 = vcmask 261120
        %v228 = vsel %vm226, %v201, 0
        %v231 = vsel %vm226, %v202, 0
        %v234 = vsel %vm226, %v203, 0
        %v237 = vsel %vm226, %v204, 0
        %v240 = vsel %vm226, %v205, 0
        %v243 = vsel %vm226, %v206, 0
        %v246 = vsel %vm226, %v207, 0
        %v249 = vsel %vm226, %v208, 0
        %v252 = vsel %vm226, %v209, 0
        %v255 = vsel %vm226, %v210, 0
        %v258 = vsel %vm226, %v211, 0
        %v261 = vsel %vm226, %v212, 0
        %v264 = vsel %vm226, %v213, 0
        %v267 = vsel %vm226, %v214, 0
        %v270 = vsel %vm226, %v215, 0
        %v273 = vsel %vm226, %v216, 0
        %v276 = vsel %vm226, %v217, 0
        %v279 = vsel %vm226, %v218, 0
        %281 = vmatprep.subr.mxu0 0.0
        %282 = vmatpush1.xpose.msra.mxu0 %v276
        %283 = vmatprep.subr.mxu0 0.0
        %284 = vmatpush1.xpose.msra.mxu0 %v279
        %285 = vmatprep.subr.mxu0 0.0
        %286 = vmatpush1.xpose.msra.mxu0 0.0
        %287 = vmatprep.subr.mxu0 0.0
        %288 = vmatpush1.xpose.msra.mxu0 0.0
        %289 = vmatprep.subr.mxu0 0.0
        %290 = vmatpush1.xpose.msra.mxu0 0.0
        %291 = vmatprep.subr.mxu0 0.0
        %292 = vmatpush1.xpose.msra.mxu0 0.0
        %293 = vmatprep.subr.mxu0 0.0
        %294 = vmatpush1.xpose.msra.mxu0 0.0
        %295 = vmatprep.subr.mxu0 0.0
        %296 = vmatpush1.xpose.msra.mxu0 0.0
        %297 = vmatprep.subr.mxu0 0.0
        %298 = vmatpush1.xpose.msra.mxu0 0.0
        %299 = vmatprep.subr.mxu0 0.0
        %300 = vmatpush1.xpose.msra.mxu0 0.0
        %301 = vmatprep.subr.mxu0 0.0
        %302 = vmatpush1.xpose.msra.mxu0 0.0
        %303 = vmatprep.subr.mxu0 0.0
        %304 = vmatpush1.xpose.msra.mxu0 0.0
        %305 = vmatprep.subr.mxu0 0.0
        %306 = vmatpush1.xpose.msra.mxu0 0.0
        %307 = vmatprep.subr.mxu0 0.0
        %308 = vmatpush1.xpose.msra.mxu0 0.0
        %309 = vmatprep.subr.mxu0 0.0
        %310 = vmatpush1.xpose.msra.mxu0 0.0
        %311 = vmatprep.subr.mxu0 0.0
        %312 = vmatpush1.xpose.msra.mxu0 0.0
        %313 = vmatprep.subr.mxu0 0.0
        %314 = vmatpush1.xpose.msra.mxu0 0.0
        %315 = vmatprep.subr.mxu0 0.0
        %316 = vmatpush1.xpose.msra.mxu0 0.0
        %317 = vmatprep.subr.mxu0 0.0
        %318 = vmatpush1.xpose.msra.mxu0 0.0
        %319 = vmatprep.subr.mxu0 0.0
        %320 = vmatpush1.xpose.msra.mxu0 0.0
        %321 = vmatprep.subr.mxu0 0.0
        %322 = vmatpush1.xpose.msra.mxu0 0.0
        %323 = vmatprep.subr.mxu0 0.0
        %324 = vmatpush1.xpose.msra.mxu0 0.0
        %325 = vmatprep.subr.mxu0 0.0
        %326 = vmatpush1.xpose.msra.mxu0 0.0
        %327 = vmatprep.subr.mxu0 0.0
        %328 = vmatpush1.xpose.msra.mxu0 0.0
        %329 = vmatprep.subr.mxu0 0.0
        %330 = vmatpush1.xpose.msra.mxu0 0.0
        %331 = vmatprep.subr.mxu0 0.0
        %332 = vmatpush1.xpose.msra.mxu0 0.0
        %333 = vmatprep.subr.mxu0 0.0
        %334 = vmatpush1.xpose.msra.mxu0 0.0
        %335 = vmatprep.subr.mxu0 0.0
        %336 = vmatpush1.xpose.msra.mxu0 0.0
        %337 = vmatprep.subr.mxu0 0.0
        %338 = vmatpush1.xpose.msra.mxu0 0.0
        %339 = vmatprep.subr.mxu0 0.0
        %340 = vmatpush1.xpose.msra.mxu0 0.0
        %341 = vmatprep.subr.mxu0 0.0
        %342 = vmatpush1.xpose.msra.mxu0 0.0
        %343 = vmatprep.subr.mxu0 0.0
        %344 = vmatpush1.xpose.msra.mxu0 0.0
        %345 = vmatprep.mubr.f32.mxu0 0.0
        %346 = vmatmul.mubr.f32.gmra.mrb[0].mxu0 %v228
        %v347 = vpop.f32.mrb[0].mxu0
        %v348 = vadd.f32 %v224, %v347
        %v349 = vpop.f32.mrb[0].mxu0
        %350 = vmatprep.mubr.f32.mxu0 0.0
        %351 = vmatmul.mubr.f32.gmra.mrb[0].mxu0 %v231
        %v352 = vpop.f32.mrb[0].mxu0
        %v353 = vadd.f32 %v224, %v352
        %v354 = vpop.f32.mrb[0].mxu0
        %355 = vmatprep.mubr.f32.mxu0 0.0
        %356 = vmatmul.mubr.f32.gmra.mrb[0].mxu0 %v234
        %v357 = vpop.f32.mrb[0].mxu0
        %v358 = vadd.f32 %v224, %v357
        %v359 = vpop.f32.mrb[0].mxu0
        %360 = vmatprep.mubr.f32.mxu0 0.0
        %361 = vmatmul.mubr.f32.gmra.mrb[0].mxu0 %v237
        %v362 = vpop.f32.mrb[0].mxu0
        %v363 = vadd.f32 %v224, %v362
        %v364 = vpop.f32.mrb[0].mxu0
        %365 = vmatprep.mubr.f32.mxu0 0.0
        %366 = vmatmul.mubr.f32.gmra.mrb[0].mxu0 %v240
        %v367 = vpop.f32.mrb[0].mxu0
        %v368 = vadd.f32 %v224, %v367
        %v369 = vpop.f32.mrb[0].mxu0
        %370 = vmatprep.mubr.f32.mxu0 0.0
        %371 = vmatmul.mubr.f32.gmra.mrb[0].mxu0 %v243
        %v372 = vpop.f32.mrb[0].mxu0
        %v373 = vadd.f32 %v224, %v372
        %v374 = vpop.f32.mrb[0].mxu0
        %375 = vmatprep.mubr.f32.mxu0 0.0
        %376 = vmatmul.mubr.f32.gmra.mrb[0].mxu0 %v246
        %v377 = vpop.f32.mrb[0].mxu0
        %v378 = vadd.f32 %v224, %v377
        %v379 = vpop.f32.mrb[0].mxu0
        %380 = vmatprep.mubr.f32.mxu0 0.0
        %381 = vmatmul.mubr.f32.gmra.mrb[0].mxu0 %v249
        %v382 = vpop.f32.mrb[0].mxu0
        %v383 = vadd.f32 %v224, %v382
        %v384 = vpop.f32.mrb[0].mxu0
        %385 = vmatprep.mubr.f32.mxu0 0.0
        %386 = vmatmul.mubr.f32.gmra.mrb[0].mxu0 %v252
        %v387 = vpop.f32.mrb[0].mxu0
        %v388 = vadd.f32 %v224, %v387
        %v389 = vpop.f32.mrb[0].mxu0
        %390 = vmatprep.mubr.f32.mxu0 0.0
        %391 = vmatmul.mubr.f32.gmra.mrb[0].mxu0 %v255
        %v392 = vpop.f32.mrb[0].mxu0
        %v393 = vadd.f32 %v224, %v392
        %v394 = vpop.f32.mrb[0].mxu0
        %395 = vmatprep.mubr.f32.mxu0 0.0
        %396 = vmatmul.mubr.f32.gmra.mrb[0].mxu0 %v258
        %v397 = vpop.f32.mrb[0].mxu0
        %v398 = vadd.f32 %v224, %v397
        %v399 = vpop.f32.mrb[0].mxu0
        %400 = vmatprep.mubr.f32.mxu0 0.0
        %401 = vmatmul.mubr.f32.gmra.mrb[0].mxu0 %v261
        %v402 = vpop.f32.mrb[0].mxu0
        %v403 = vadd.f32 %v224, %v402
        %v404 = vpop.f32.mrb[0].mxu0
        %405 = vmatprep.mubr.f32.mxu0 0.0
        %406 = vmatmul.mubr.f32.gmra.mrb[0].mxu0 %v264
        %v407 = vpop.f32.mrb[0].mxu0
        %v408 = vadd.f32 %v224, %v407
        %v409 = vpop.f32.mrb[0].mxu0
        %410 = vmatprep.mubr.f32.mxu0 0.0
        %411 = vmatmul.mubr.f32.gmra.mrb[0].mxu0 %v267
        %v412 = vpop.f32.mrb[0].mxu0
        %v413 = vadd.f32 %v224, %v412
        %v414 = vpop.f32.mrb[0].mxu0
        %415 = vmatprep.mubr.f32.mxu0 0.0
        %416 = vmatmul.mubr.f32.gmra.mrb[0].mxu0 %v270
        %v417 = vpop.f32.mrb[0].mxu0
        %v418 = vadd.f32 %v224, %v417
        %v419 = vpop.f32.mrb[0].mxu0
        %420 = vmatprep.mubr.f32.mxu0 0.0
        %421 = vmatmul.mubr.f32.gmra.mrb[0].mxu0 %v273
        %v422 = vpop.f32.mrb[0].mxu0
        %v423 = vadd.f32 %v224, %v422
        %v424 = vpop.f32.mrb[0].mxu0
        %425 = vdwg.mxu0
        %v426 = vtanh.pop %v348
        %v427 = vtanh.pop %v353
        %v428 = vtanh.pop %v358
        %v429 = vtanh.pop %v363
        %v430 = vtanh.pop %v368
        %v431 = vtanh.pop %v373
        %v432 = vtanh.pop %v378
        %v433 = vtanh.pop %v383
        %v434 = vtanh.pop %v388
        %v435 = vtanh.pop %v393
        %v436 = vtanh.pop %v398
        %v437 = vtanh.pop %v403
        %v438 = vtanh.pop %v408
        %v439 = vtanh.pop %v413
        %v440 = vtanh.pop %v418
        %v441 = vtanh.pop %v423
        %v442 = vld [vmem:[%s3] sm:$0xff]
        %v443 = vld [vmem:[%s3 + $0x8] sm:$0xff]
        %v444 = vld [vmem:[%s3 + $0x10] sm:$0xff]
        %v445 = vld [vmem:[%s3 + $0x18] sm:$0xff]
        %vm446 = vcmask 130048
        %v448 = vsel %vm446, %v426, 0
        %v451 = vsel %vm446, %v427, 0
        %v454 = vsel %vm446, %v428, 0
        %v457 = vsel %vm446, %v429, 0
        %v460 = vsel %vm446, %v430, 0
        %v463 = vsel %vm446, %v431, 0
        %v466 = vsel %vm446, %v432, 0
        %v469 = vsel %vm446, %v433, 0
        %v472 = vsel %vm446, %v434, 0
        %v475 = vsel %vm446, %v435, 0
        %v478 = vsel %vm446, %v436, 0
        %v481 = vsel %vm446, %v437, 0
        %v484 = vsel %vm446, %v438, 0
        %v487 = vsel %vm446, %v439, 0
        %v490 = vsel %vm446, %v440, 0
        %v493 = vsel %vm446, %v441, 0
        %v496 = vsel %vm446, %v442, 0
        %v499 = vsel %vm446, %v443, 0
        %v502 = vsel %vm446, %v444, 0
        %v505 = vsel %vm446, %v445, 0
        %507 = vmatprep.subr.mxu0 0.0
        %508 = vmatpush1.xpose.msra.mxu0 %v496
        %509 = vmatprep.subr.mxu0 0.0
        %510 = vmatpush1.xpose.msra.mxu0 %v499
        %511 = vmatprep.subr.mxu0 0.0
        %512 = vmatpush1.xpose.msra.mxu0 %v502
        %513 = vmatprep.subr.mxu0 0.0
        %514 = vmatpush1.xpose.msra.mxu0 %v505
        %515 = vmatprep.subr.mxu0 0.0
        %516 = vmatpush1.xpose.msra.mxu0 0.0
        %517 = vmatprep.subr.mxu0 0.0
        %518 = vmatpush1.xpose.msra.mxu0 0.0
        %519 = vmatprep.subr.mxu0 0.0
        %520 = vmatpush1.xpose.msra.mxu0 0.0
        %521 = vmatprep.subr.mxu0 0.0
        %522 = vmatpush1.xpose.msra.mxu0 0.0
        %523 = vmatprep.subr.mxu0 0.0
        %524 = vmatpush1.xpose.msra.mxu0 0.0
        %525 = vmatprep.subr.mxu0 0.0
        %526 = vmatpush1.xpose.msra.mxu0 0.0
        %527 = vmatprep.subr.mxu0 0.0
        %528 = vmatpush1.xpose.msra.mxu0 0.0
        %529 = vmatprep.subr.mxu0 0.0
        %530 = vmatpush1.xpose.msra.mxu0 0.0
        %531 = vmatprep.subr.mxu0 0.0
        %532 = vmatpush1.xpose.msra.mxu0 0.0
        %533 = vmatprep.subr.mxu0 0.0
        %534 = vmatpush1.xpose.msra.mxu0 0.0
        %535 = vmatprep.subr.mxu0 0.0
        %536 = vmatpush1.xpose.msra.mxu0 0.0
        %537 = vmatprep.subr.mxu0 0.0
        %538 = vmatpush1.xpose.msra.mxu0 0.0
        %539 = vmatprep.subr.mxu0 0.0
        %540 = vmatpush1.xpose.msra.mxu0 0.0
        %541 = vmatprep.subr.mxu0 0.0
        %542 = vmatpush1.xpose.msra.mxu0 0.0
        %543 = vmatprep.subr.mxu0 0.0
        %544 = vmatpush1.xpose.msra.mxu0 0.0
        %545 = vmatprep.subr.mxu0 0.0
        %546 = vmatpush1.xpose.msra.mxu0 0.0
        %547 = vmatprep.subr.mxu0 0.0
        %548 = vmatpush1.xpose.msra.mxu0 0.0
        %549 = vmatprep.subr.mxu0 0.0
        %550 = vmatpush1.xpose.msra.mxu0 0.0
        %551 = vmatprep.subr.mxu0 0.0
        %552 = vmatpush1.xpose.msra.mxu0 0.0
        %553 = vmatprep.subr.mxu0 0.0
        %554 = vmatpush1.xpose.msra.mxu0 0.0
        %555 = vmatprep.subr.mxu0 0.0
        %556 = vmatpush1.xpose.msra.mxu0 0.0
        %557 = vmatprep.subr.mxu0 0.0
        %558 = vmatpush1.xpose.msra.mxu0 0.0
        %559 = vmatprep.subr.mxu0 0.0
        %560 = vmatpush1.xpose.msra.mxu0 0.0
        %561 = vmatprep.subr.mxu0 0.0
        %562 = vmatpush1.xpose.msra.mxu0 0.0
        %563 = vmatprep.subr.mxu0 0.0
        %564 = vmatpush1.xpose.msra.mxu0 0.0
        %565 = vmatprep.subr.mxu0 0.0
        %566 = vmatpush1.xpose.msra.mxu0 0.0
        %567 = vmatprep.subr.mxu0 0.0
        %568 = vmatpush1.xpose.msra.mxu0 0.0
        %569 = vmatprep.subr.mxu0 0.0
        %570 = vmatpush1.xpose.msra.mxu0 0.0
        %571 = vmatprep.mubr.f32.mxu0 0.0
        %572 = vmatmul.mubr.f32.gmra.mrb[0].mxu0 %v448
        %v573 = vpop.f32.mrb[0].mxu0
        %v574 = vadd.f32 0.0, %v573
        %v575 = vpop.f32.mrb[0].mxu0
        %576 = vmatprep.mubr.f32.mxu0 0.0
        %577 = vmatmul.mubr.f32.gmra.mrb[0].mxu0 %v451
        %v578 = vpop.f32.mrb[0].mxu0
        %v579 = vadd.f32 0.0, %v578
        %v580 = vpop.f32.mrb[0].mxu0
        %581 = vmatprep.mubr.f32.mxu0 0.0
        %582 = vmatmul.mubr.f32.gmra.mrb[0].mxu0 %v454
        %v583 = vpop.f32.mrb[0].mxu0
        %v584 = vadd.f32 0.0, %v583
        %v585 = vpop.f32.mrb[0].mxu0
        %586 = vmatprep.mubr.f32.mxu0 0.0
        %587 = vmatmul.mubr.f32.gmra.mrb[0].mxu0 %v457
        %v588 = vpop.f32.mrb[0].mxu0
        %v589 = vadd.f32 0.0, %v588
        %v590 = vpop.f32.mrb[0].mxu0
        %591 = vmatprep.mubr.f32.mxu0 0.0
        %592 = vmatmul.mubr.f32.gmra.mrb[0].mxu0 %v460
        %v593 = vpop.f32.mrb[0].mxu0
        %v594 = vadd.f32 0.0, %v593
        %v595 = vpop.f32.mrb[0].mxu0
        %596 = vmatprep.mubr.f32.mxu0 0.0
        %597 = vmatmul.mubr.f32.gmra.mrb[0].mxu0 %v463
        %v598 = vpop.f32.mrb[0].mxu0
        %v599 = vadd.f32 0.0, %v598
        %v600 = vpop.f32.mrb[0].mxu0
        %601 = vmatprep.mubr.f32.mxu0 0.0
        %602 = vmatmul.mubr.f32.gmra.mrb[0].mxu0 %v466
        %v603 = vpop.f32.mrb[0].mxu0
        %v604 = vadd.f32 0.0, %v603
        %v605 = vpop.f32.mrb[0].mxu0
        %606 = vmatprep.mubr.f32.mxu0 0.0
        %607 = vmatmul.mubr.f32.gmra.mrb[0].mxu0 %v469
        %v608 = vpop.f32.mrb[0].mxu0
        %v609 = vadd.f32 0.0, %v608
        %v610 = vpop.f32.mrb[0].mxu0
        %611 = vmatprep.mubr.f32.mxu0 0.0
        %612 = vmatmul.mubr.f32.gmra.mrb[0].mxu0 %v472
        %v613 = vpop.f32.mrb[0].mxu0
        %v614 = vadd.f32 0.0, %v613
        %v615 = vpop.f32.mrb[0].mxu0
        %616 = vmatprep.mubr.f32.mxu0 0.0
        %617 = vmatmul.mubr.f32.gmra.mrb[0].mxu0 %v475
        %v618 = vpop.f32.mrb[0].mxu0
        %v619 = vadd.f32 0.0, %v618
        %v620 = vpop.f32.mrb[0].mxu0
        %621 = vmatprep.mubr.f32.mxu0 0.0
        %622 = vmatmul.mubr.f32.gmra.mrb[0].mxu0 %v478
        %v623 = vpop.f32.mrb[0].mxu0
        %v624 = vadd.f32 0.0, %v623
        %v625 = vpop.f32.mrb[0].mxu0
        %626 = vmatprep.mubr.f32.mxu0 0.0
        %627 = vmatmul.mubr.f32.gmra.mrb[0].mxu0 %v481
        %v628 = vpop.f32.mrb[0].mxu0
        %v629 = vadd.f32 0.0, %v628
        %v630 = vpop.f32.mrb[0].mxu0
        %631 = vmatprep.mubr.f32.mxu0 0.0
        %632 = vmatmul.mubr.f32.gmra.mrb[0].mxu0 %v484
        %v633 = vpop.f32.mrb[0].mxu0
        %v634 = vadd.f32 0.0, %v633
        %v635 = vpop.f32.mrb[0].mxu0
        %636 = vmatprep.mubr.f32.mxu0 0.0
        %637 = vmatmul.mubr.f32.gmra.mrb[0].mxu0 %v487
        %v638 = vpop.f32.mrb[0].mxu0
        %v639 = vadd.f32 0.0, %v638
        %v640 = vpop.f32.mrb[0].mxu0
        %641 = vmatprep.mubr.f32.mxu0 0.0
        %642 = vmatmul.mubr.f32.gmra.mrb[0].mxu0 %v490
        %v643 = vpop.f32.mrb[0].mxu0
        %v644 = vadd.f32 0.0, %v643
        %v645 = vpop.f32.mrb[0].mxu0
        %646 = vmatprep.mubr.f32.mxu0 0.0
        %647 = vmatmul.mubr.f32.gmra.mrb[0].mxu0 %v493
        %v648 = vpop.f32.mrb[0].mxu0
        %v649 = vadd.f32 0.0, %v648
        %v650 = vpop.f32.mrb[0].mxu0
        %651 = vdwg.mxu0
        %v652 = vsel %vm226, %v574, -inf
        %v653 = vsel %vm226, %v579, -inf
        %v654 = vmax.f32 %v652, %v653
        %v655 = vrot.slane %v654, 4
        %v656 = vmax.f32 %v654, %v655
        %v657 = vrot.slane %v656, 2
        %v658 = vmax.f32 %v656, %v657
        %v659 = vrot.slane %v658, 1
        %v660 = vmax.f32 %v658, %v659
        %v661 = vsel %vm226, %v584, -inf
        %v662 = vsel %vm226, %v589, -inf
        %v663 = vmax.f32 %v661, %v662
        %v664 = vrot.slane %v663, 4
        %v665 = vmax.f32 %v663, %v664
        %v666 = vrot.slane %v665, 2
        %v667 = vmax.f32 %v665, %v666
        %v668 = vrot.slane %v667, 1
        %v669 = vmax.f32 %v667, %v668
        %v670 = vsel %vm226, %v594, -inf
        %v671 = vsel %vm226, %v599, -inf
        %v672 = vmax.f32 %v670, %v671
        %v673 = vrot.slane %v672, 4
        %v674 = vmax.f32 %v672, %v673
        %v675 = vrot.slane %v674, 2
        %v676 = vmax.f32 %v674, %v675
        %v677 = vrot.slane %v676, 1
        %v678 = vmax.f32 %v676, %v677
        %v679 = vsel %vm226, %v604, -inf
        %v680 = vsel %vm226, %v609, -inf
        %v681 = vmax.f32 %v679, %v680
        %v682 = vrot.slane %v681, 4
        %v683 = vmax.f32 %v681, %v682
        %v684 = vrot.slane %v683, 2
        %v685 = vmax.f32 %v683, %v684
        %v686 = vrot.slane %v685, 1
        %v687 = vmax.f32 %v685, %v686
        %v688 = vsel %vm226, %v614, -inf
        %v689 = vsel %vm226, %v619, -inf
        %v690 = vmax.f32 %v688, %v689
        %v691 = vrot.slane %v690, 4
        %v692 = vmax.f32 %v690, %v691
        %v693 = vrot.slane %v692, 2
        %v694 = vmax.f32 %v692, %v693
        %v695 = vrot.slane %v694, 1
        %v696 = vmax.f32 %v694, %v695
        %v697 = vsel %vm226, %v624, -inf
        %v698 = vsel %vm226, %v629, -inf
        %v699 = vmax.f32 %v697, %v698
        %v700 = vrot.slane %v699, 4
        %v701 = vmax.f32 %v699, %v700
        %v702 = vrot.slane %v701, 2
        %v703 = vmax.f32 %v701, %v702
        %v704 = vrot.slane %v703, 1
        %v705 = vmax.f32 %v703, %v704
        %v706 = vsel %vm226, %v634, -inf
        %v707 = vsel %vm226, %v639, -inf
        %v708 = vmax.f32 %v706, %v707
        %v709 = vrot.slane %v708, 4
        %v710 = vmax.f32 %v708, %v709
        %v711 = vrot.slane %v710, 2
        %v712 = vmax.f32 %v710, %v711
        %v713 = vrot.slane %v712, 1
        %v714 = vmax.f32 %v712, %v713
        %v715 = vsel %vm226, %v644, -inf
        %v716 = vsel %vm226, %v649, -inf
        %v717 = vmax.f32 %v715, %v716
        %v718 = vrot.slane %v717, 4
        %v719 = vmax.f32 %v717, %v718
        %v720 = vrot.slane %v719, 2
        %v721 = vmax.f32 %v719, %v720
        %v722 = vrot.slane %v721, 1
        %v723 = vmax.f32 %v721, %v722
        %v724 = vsub.f32 %v574, %v660
        %v725 = vsub.f32 %v579, %v660
        %v726 = vsub.f32 %v584, %v669
        %v727 = vsub.f32 %v589, %v669
        %v728 = vsub.f32 %v594, %v678
        %v729 = vsub.f32 %v599, %v678
        %v730 = vsub.f32 %v604, %v687
        %v731 = vsub.f32 %v609, %v687
        %v732 = vsub.f32 %v614, %v696
        %v733 = vsub.f32 %v619, %v696
        %v734 = vsub.f32 %v624, %v705
        %v735 = vsub.f32 %v629, %v705
        %v736 = vsub.f32 %v634, %v714
        %v737 = vsub.f32 %v639, %v714
        %v738 = vsub.f32 %v644, %v723
        %v739 = vsub.f32 %v649, %v723
        %v740 = vmul.f32 %v724, 1.442695
        %v741 = vpow.pop %v740
        %v742 = vmul.f32 %v725, 1.442695
        %v743 = vpow.pop %v742
        %v744 = vmul.f32 %v726, 1.442695
        %v745 = vpow.pop %v744
        %v746 = vmul.f32 %v727, 1.442695
        %v747 = vpow.pop %v746
        %v748 = vmul.f32 %v728, 1.442695
        %v749 = vpow.pop %v748
        %v750 = vmul.f32 %v729, 1.442695
        %v751 = vpow.pop %v750
        %v752 = vmul.f32 %v730, 1.442695
        %v753 = vpow.pop %v752
        %v754 = vmul.f32 %v731, 1.442695
        %v755 = vpow.pop %v754
        %v756 = vmul.f32 %v732, 1.442695
        %v757 = vpow.pop %v756
        %v758 = vmul.f32 %v733, 1.442695
        %v759 = vpow.pop %v758
        %v760 = vmul.f32 %v734, 1.442695
        %v761 = vpow.pop %v760
        %v762 = vmul.f32 %v735, 1.442695
        %v763 = vpow.pop %v762
        %v764 = vmul.f32 %v736, 1.442695
        %v765 = vpow.pop %v764
        %v766 = vmul.f32 %v737, 1.442695
        %v767 = vpow.pop %v766
        %v768 = vmul.f32 %v738, 1.442695
        %v769 = vpow.pop %v768
        %v770 = vmul.f32 %v739, 1.442695
        %v771 = vpow.pop %v770
        %v772 = vsel %vm226, %v741, 0.0
        %v773 = vsel %vm226, %v743, 0.0
        %v774 = vadd.f32 %v772, %v773
        %v775 = vrot.slane %v774, 4
        %v776 = vadd.f32 %v774, %v775
        %v777 = vrot.slane %v776, 2
        %v778 = vadd.f32 %v776, %v777
        %v779 = vrot.slane %v778, 1
        %v780 = vadd.f32 %v778, %v779
        %v781 = vsel %vm226, %v745, 0.0
        %v782 = vsel %vm226, %v747, 0.0
        %v783 = vadd.f32 %v781, %v782
        %v784 = vrot.slane %v783, 4
        %v785 = vadd.f32 %v783, %v784
        %v786 = vrot.slane %v785, 2
        %v787 = vadd.f32 %v785, %v786
        %v788 = vrot.slane %v787, 1
        %v789 = vadd.f32 %v787, %v788
        %v790 = vsel %vm226, %v749, 0.0
        %v791 = vsel %vm226, %v751, 0.0
        %v792 = vadd.f32 %v790, %v791
        %v793 = vrot.slane %v792, 4
        %v794 = vadd.f32 %v792, %v793
        %v795 = vrot.slane %v794, 2
        %v796 = vadd.f32 %v794, %v795
        %v797 = vrot.slane %v796, 1
        %v798 = vadd.f32 %v796, %v797
        %v799 = vsel %vm226, %v753, 0.0
        %v800 = vsel %vm226, %v755, 0.0
        %v801 = vadd.f32 %v799, %v800
        %v802 = vrot.slane %v801, 4
        %v803 = vadd.f32 %v801, %v802
        %v804 = vrot.slane %v803, 2
        %v805 = vadd.f32 %v803, %v804
        %v806 = vrot.slane %v805, 1
        %v807 = vadd.f32 %v805, %v806
        %v808 = vsel %vm226, %v757, 0.0
        %v809 = vsel %vm226, %v759, 0.0
        %v810 = vadd.f32 %v808, %v809
        %v811 = vrot.slane %v810, 4
        %v812 = vadd.f32 %v810, %v811
        %v813 = vrot.slane %v812, 2
        %v814 = vadd.f32 %v812, %v813
        %v815 = vrot.slane %v814, 1
        %v816 = vadd.f32 %v814, %v815
        %v817 = vsel %vm226, %v761, 0.0
        %v818 = vsel %vm226, %v763, 0.0
        %v819 = vadd.f32 %v817, %v818
        %v820 = vrot.slane %v819, 4
        %v821 = vadd.f32 %v819, %v820
        %v822 = vrot.slane %v821, 2
        %v823 = vadd.f32 %v821, %v822
        %v824 = vrot.slane %v823, 1
        %v825 = vadd.f32 %v823, %v824
        %v826 = vsel %vm226, %v765, 0.0
        %v827 = vsel %vm226, %v767, 0.0
        %v828 = vadd.f32 %v826, %v827
        %v829 = vrot.slane %v828, 4
        %v830 = vadd.f32 %v828, %v829
        %v831 = vrot.slane %v830, 2
        %v832 = vadd.f32 %v830, %v831
        %v833 = vrot.slane %v832, 1
        %v834 = vadd.f32 %v832, %v833
        %v835 = vsel %vm226, %v769, 0.0
        %v836 = vsel %vm226, %v771, 0.0
        %v837 = vadd.f32 %v835, %v836
        %v838 = vrot.slane %v837, 4
        %v839 = vadd.f32 %v837, %v838
        %v840 = vrot.slane %v839, 2
        %v841 = vadd.f32 %v839, %v840
        %v842 = vrot.slane %v841, 1
        %v843 = vadd.f32 %v841, %v842
        %v844 = vrcp.pop %v780
        %v845 = vrcp.pop %v789
        %v846 = vrcp.pop %v798
        %v847 = vrcp.pop %v807
        %v848 = vrcp.pop %v816
        %v849 = vrcp.pop %v825
        %v850 = vrcp.pop %v834
        %v851 = vrcp.pop %v843
        %v852 = vmul.f32 %v741, %v844
        %v853 = vmul.f32 %v743, %v844
        %v854 = vmul.f32 %v745, %v845
        %v855 = vmul.f32 %v747, %v845
        %v856 = vmul.f32 %v749, %v846
        %v857 = vmul.f32 %v751, %v846
        %v858 = vmul.f32 %v753, %v847
        %v859 = vmul.f32 %v755, %v847
        %v860 = vmul.f32 %v757, %v848
        %v861 = vmul.f32 %v759, %v848
        %v862 = vmul.f32 %v761, %v849
        %v863 = vmul.f32 %v763, %v849
        %v864 = vmul.f32 %v765, %v850
        %v865 = vmul.f32 %v767, %v850
        %v866 = vmul.f32 %v769, %v851
        %v867 = vmul.f32 %v771, %v851
        %v868 = vmul.f32 %v852, %v201
        %v869 = vmul.f32 %v853, %v202
        %v870 = vmul.f32 %v854, %v203
        %v871 = vmul.f32 %v855, %v204
        %v872 = vmul.f32 %v856, %v205
        %v873 = vmul.f32 %v857, %v206
        %v874 = vmul.f32 %v858, %v207
        %v875 = vmul.f32 %v859, %v208
        %v876 = vmul.f32 %v860, %v209
        %v877 = vmul.f32 %v861, %v210
        %v878 = vmul.f32 %v862, %v211
        %v879 = vmul.f32 %v863, %v212
        %v880 = vmul.f32 %v864, %v213
        %v881 = vmul.f32 %v865, %v214
        %v882 = vmul.f32 %v866, %v215
        %v883 = vmul.f32 %v867, %v216
        %v884 = vsel %vm226, %v868, 0.0
        %v885 = vsel %vm226, %v869, 0.0
        %v886 = vadd.f32 %v884, %v885
        %v887 = vrot.slane %v886, 4
        %v888 = vadd.f32 %v886, %v887
        %v889 = vrot.slane %v888, 2
        %v890 = vadd.f32 %v888, %v889
        %v891 = vrot.slane %v890, 1
        %v892 = vadd.f32 %v890, %v891
        %v893 = vsel %vm226, %v870, 0.0
        %v894 = vsel %vm226, %v871, 0.0
        %v895 = vadd.f32 %v893, %v894
        %v896 = vrot.slane %v895, 4
        %v897 = vadd.f32 %v895, %v896
        %v898 = vrot.slane %v897, 2
        %v899 = vadd.f32 %v897, %v898
        %v900 = vrot.slane %v899, 1
        %v901 = vadd.f32 %v899, %v900
        %v902 = vsel %vm226, %v872, 0.0
        %v903 = vsel %vm226, %v873, 0.0
        %v904 = vadd.f32 %v902, %v903
        %v905 = vrot.slane %v904, 4
        %v906 = vadd.f32 %v904, %v905
        %v907 = vrot.slane %v906, 2
        %v908 = vadd.f32 %v906, %v907
        %v909 = vrot.slane %v908, 1
        %v910 = vadd.f32 %v908, %v909
        %v911 = vsel %vm226, %v874, 0.0
        %v912 = vsel %vm226, %v875, 0.0
        %v913 = vadd.f32 %v911, %v912
        %v914 = vrot.slane %v913, 4
        %v915 = vadd.f32 %v913, %v914
        %v916 = vrot.slane %v915, 2
        %v917 = vadd.f32 %v915, %v916
        %v918 = vrot.slane %v917, 1
        %v919 = vadd.f32 %v917, %v918
        %v920 = vsel %vm226, %v876, 0.0
        %v921 = vsel %vm226, %v877, 0.0
        %v922 = vadd.f32 %v920, %v921
        %v923 = vrot.slane %v922, 4
        %v924 = vadd.f32 %v922, %v923
        %v925 = vrot.slane %v924, 2
        %v926 = vadd.f32 %v924, %v925
        %v927 = vrot.slane %v926, 1
        %v928 = vadd.f32 %v926, %v927
        %v929 = vsel %vm226, %v878, 0.0
        %v930 = vsel %vm226, %v879, 0.0
        %v931 = vadd.f32 %v929, %v930
        %v932 = vrot.slane %v931, 4
        %v933 = vadd.f32 %v931, %v932
        %v934 = vrot.slane %v933, 2
        %v935 = vadd.f32 %v933, %v934
        %v936 = vrot.slane %v935, 1
        %v937 = vadd.f32 %v935, %v936
        %v938 = vsel %vm226, %v880, 0.0
        %v939 = vsel %vm226, %v881, 0.0
        %v940 = vadd.f32 %v938, %v939
        %v941 = vrot.slane %v940, 4
        %v942 = vadd.f32 %v940, %v941
        %v943 = vrot.slane %v942, 2
        %v944 = vadd.f32 %v942, %v943
        %v945 = vrot.slane %v944, 1
        %v946 = vadd.f32 %v944, %v945
        %v947 = vsel %vm226, %v882, 0.0
        %v948 = vsel %vm226, %v883, 0.0
        %v949 = vadd.f32 %v947, %v948
        %v950 = vrot.slane %v949, 4
        %v951 = vadd.f32 %v949, %v950
        %v952 = vrot.slane %v951, 2
        %v953 = vadd.f32 %v951, %v952
        %v954 = vrot.slane %v953, 1
        %v955 = vadd.f32 %v953, %v954
        %vm964 = vcmask 1041409
        %v965 = vsel %vm964, %v901, %v892
        %vm966 = vcmask 1042434
        %v967 = vsel %vm966, %v910, %v965
        %vm968 = vcmask 1043459
        %v969 = vsel %vm968, %v919, %v967
        %vm970 = vcmask 1044484
        %v971 = vsel %vm970, %v928, %v969
        %vm972 = vcmask 1045509
        %v973 = vsel %vm972, %v937, %v971
        %vm974 = vcmask 1046534
        %v975 = vsel %vm974, %v946, %v973
        %vm976 = vcmask 1047559
        %v977 = vsel %vm976, %v955, %v975
        %979 = vst.msk [vmem:[%s193] sm:$0xff] %vm226, %v977
        %s980 = sand.u32 %s115, 1
        %s981 = scalar_lea.sflag [#allocation3], %s980
        %s982 = sand.u32 %s115, 1
        %s983 = smul.addr %s982, 8
        %s984 = scalar_lea.vmem [#allocation2], %s983
        // Predicated region
        $region37: #{self_attention_pooling.1} parent=35 // pred_check
          %p985 = pneg %p125
        $region38: #{self_attention_pooling.1} parent=35 // pred_check_branch
          %987 = sbr.rel (%p985) target = $region40
        $region39: #{self_attention_pooling.1} parent=35 // pred_region
          %s989 = ssub.s32 128, 128
          %990 = vsyncadd %s981, %s989
          %s991 = smul.addr %s18, 128
          %s992 = scalar_lea.hbm %s4, %s991
          %s994 = sshll.u32 %s984, 4
          %s995 = int_to_ptr.vmem [resolvable:$true] %s994
          %997 = dma.vmem_to_hbm [thread:$0]  %s995, 128, %s992, %s981
        $region40: #{self_attention_pooling.1} parent=35 // pred_fallthru
          _
      $region36: #{self_attention_pooling.1} parent=5 // pred_fallthru
        _
      %p998 = scmp.le.s32.totalorder 2, %s13
      // Predicated region
      $region41: #{self_attention_pooling.1} parent=5 // pred_check
        %p999 = pneg %p998
      $region42: #{self_attention_pooling.1} parent=5 // pred_check_branch
        %1001 = sbr.rel (%p999) target = $region44
      $region43: #{self_attention_pooling.1} parent=5 // pred_region
        %s1002 = ssub.s32 %s13, 2
        // Predicated region
        $region45: #{self_attention_pooling.1} parent=43 // pred_check
          %p1003 = pneg %p131
        $region46: #{self_attention_pooling.1} parent=43 // pred_check_branch
          %1005 = sbr.rel (%p1003) target = $region48
        $region47: #{self_attention_pooling.1} parent=43 // pred_region
          %s1006 = sand.u32 %s116, 1
          %s1007 = scalar_lea.sflag [#allocation3], %s1006
          %s1008 = sand.u32 %s116, 1
          %s1009 = smul.addr %s1008, 8
          %s1010 = scalar_lea.vmem [#allocation2], %s1009
          %1011 = dma.done %s1007, 128
        $region48: #{self_attention_pooling.1} parent=43 // pred_fallthru
          _
      $region44: #{self_attention_pooling.1} parent=5 // pred_fallthru
        _
    $region6: #{self_attention_pooling.1} parent=1 // loop_footer
      %s17 = sadd.s32 1, %s13
    $region7: #{self_attention_pooling.1} parent=1 // loop_footer_branch
      %12 = sbr.rel target = $region3
    $region8: #{self_attention_pooling.1} parent=1 // loop_exit
      _
    %1012 = vsyncpa [#allocation3], 1
    %s1013 = scalar_lea.sflag [#allocation3], 1
    %1014 = vsyncpa %s1013, 1

</llo_original>
